<compile_context>
chip_gen: v5e
topology: v5e:2x2
jax: 0.10.0
libtpu: 0.0.40
codegen_flags: <defaults>
</compile_context>

<pallas_src>
import functools

import jax
import jax.numpy as jnp
from jax.experimental import pallas as pl
from jax.experimental.pallas import tpu as pltpu


def _round_up(x, m):
    return (x + m - 1) // m * m


def _gcn_kernel(inp_ref, w_ref, b_ref, adj_ref, out_ref, support_ref):
    # support = inp @ W, computed once on the first row tile; stays resident
    # in VMEM scratch for all subsequent adjacency row tiles.
    @pl.when(pl.program_id(0) == 0)
    def _():
        support_ref[...] = jnp.dot(
            inp_ref[...], w_ref[...], preferred_element_type=jnp.float32
        ).astype(support_ref.dtype)

    # output_tile = adj_tile @ support + bias   (MXU, f32 accumulate)
    acc = jnp.dot(adj_ref[...], support_ref[...],
                  preferred_element_type=jnp.float32)
    out_ref[...] = (acc + b_ref[...]).astype(out_ref.dtype)


@functools.partial(jax.jit, static_argnames=("tm", "num_row_tiles"))
def _gcn_pallas(inp_p, w_p, b_p, adj_p, *, tm, num_row_tiles):
    N_pad, F_in_pad = inp_p.shape
    _, F_out_pad = w_p.shape
    compute_dtype = inp_p.dtype

    cost = pl.CostEstimate(
        flops=2 * N_pad * F_in_pad * F_out_pad + 2 * N_pad * N_pad * F_out_pad,
        transcendentals=0,
        bytes_accessed=4 * (N_pad * F_in_pad + N_pad * N_pad
                            + F_in_pad * F_out_pad + F_out_pad
                            + N_pad * F_out_pad),
    )

    return pl.pallas_call(
        _gcn_kernel,
        out_shape=jax.ShapeDtypeStruct((N_pad, F_out_pad), jnp.float32),
        grid_spec=pltpu.PrefetchScalarGridSpec(
            num_scalar_prefetch=0,
            grid=(num_row_tiles,),
            in_specs=[
                # inp / weight / bias: constant block index -> fetched once,
                # resident across the whole grid.
                pl.BlockSpec((N_pad, F_in_pad), lambda i: (0, 0)),
                pl.BlockSpec((F_in_pad, F_out_pad), lambda i: (0, 0)),
                pl.BlockSpec((1, F_out_pad), lambda i: (0, 0)),
                # adj: streamed row tiles (the only per-step HBM traffic).
                pl.BlockSpec((tm, N_pad), lambda i: (i, 0)),
            ],
            out_specs=pl.BlockSpec((tm, F_out_pad), lambda i: (i, 0)),
            scratch_shapes=[pltpu.VMEM((N_pad, F_out_pad), compute_dtype)],
        ),
        compiler_params=pltpu.CompilerParams(
            # Row axis carries the `support` scratch dependence -> arbitrary.
            dimension_semantics=("arbitrary",),
            vmem_limit_bytes=48 * 1024 * 1024,
        ),
        cost_estimate=cost,
    )(inp_p, w_p, b_p, adj_p)


def graph_convolution(inp, adj, weight, bias=None, *, use_bf16=False):
    """Pallas implementation of GraphConvolution.forward.

    inp [N, F_in], adj [N, N], weight [F_in, F_out], bias [F_out] or None.
    Returns [N, F_out] float32.
    """
    N, F_in = inp.shape
    F_in_w, F_out = weight.shape
    assert F_in == F_in_w
    assert adj.shape == (N, N)

    compute_dtype = jnp.bfloat16 if use_bf16 else jnp.float32
    itemsize = jnp.dtype(compute_dtype).itemsize

    # ---- padding for lane/sublane-dense layouts -----------------------------
    F_out_pad = _round_up(F_out, 128)   # lane-dense output + full MXU width
    F_in_pad = _round_up(F_in, 8)       # clean sublane layout for `weight`

    # Row tile for adj: multiple of 128, sized so one double-buffered adj tile
    # stays well inside VMEM on every generation (v7x: 64 MiB physical).
    n_lane = _round_up(N, 128)
    adj_tile_budget = 8 * 1024 * 1024   # bytes per buffer (x2 double-buffered)
    max_rows = max(128, (adj_tile_budget // (n_lane * itemsize)) // 128 * 128)
    tm = min(512, max_rows, n_lane)
    N_pad = _round_up(N, tm)
    num_row_tiles = N_pad // tm

    # Zero padding is exact: padded rows/cols contribute nothing to the result.
    inp_p = jnp.zeros((N_pad, F_in_pad), compute_dtype).at[:N, :F_in].set(
        inp.astype(compute_dtype))
    adj_p = jnp.zeros((N_pad, N_pad), compute_dtype).at[:N, :N].set(
        adj.astype(compute_dtype))
    w_p = jnp.zeros((F_in_pad, F_out_pad), compute_dtype).at[:F_in, :F_out].set(
        weight.astype(compute_dtype))
    b_p = jnp.zeros((1, F_out_pad), jnp.float32)
    if bias is not None:
        b_p = b_p.at[0, :F_out].set(bias.astype(jnp.float32))

    out_p = _gcn_pallas(inp_p, w_p, b_p, adj_p,
                        tm=tm, num_row_tiles=num_row_tiles)
    return out_p[:N, :F_out]


if __name__ == "__main__":
    # Small shapes consistent with GraphConvolution(in_features, out_features).
    N, F_IN, F_OUT = 64, 32, 16

    key = jax.random.PRNGKey(0)
    k_inp, k_adj, k_w, k_b = jax.random.split(key, 4)

    inp = jax.random.normal(k_inp, (N, F_IN), dtype=jnp.float32)
    a = jax.random.uniform(k_adj, (N, N), dtype=jnp.float32)
    adj = (a + a.T) * 0.5                      # symmetric dense adjacency

    weight = jax.random.normal(k_w, (F_IN, F_OUT), dtype=jnp.float32)
    bias = jax.random.normal(k_b, (F_OUT,), dtype=jnp.float32)

    ref = adj @ (inp @ weight) + bias[None, :]

    # f32 path (default, with bias)
    out = jax.block_until_ready(graph_convolution(inp, adj, weight, bias))
    assert out.shape == (N, F_OUT)
    assert jnp.allclose(out, ref, atol=1e-4, rtol=1e-4)

    # no-bias path (same compiled kernel: bias=None -> zero bias row)
    out_nb = jax.block_until_ready(graph_convolution(inp, adj, weight, None))
    assert jnp.allclose(out_nb, adj @ (inp @ weight), atol=1e-4, rtol=1e-4)

    # bf16 fast path (bf16 operands, f32 MXU accumulation) — loose tolerance.
    out_bf16 = jax.block_until_ready(
        graph_convolution(inp, adj, weight, bias, use_bf16=True))
    assert jnp.allclose(out_bf16, ref, atol=1.0, rtol=0.1)

    print("KERNEL_OK")
</pallas_src>

<mosaic_0001>
module attributes {stable_mosaic.version = 11 : i64} {
  func.func @_gcn_kernel(%arg0: i32, %arg1: memref<128x32xf32, #tpu.memory_space<vmem>>, %arg2: memref<32x128xf32, #tpu.memory_space<vmem>>, %arg3: memref<1x128xf32, #tpu.memory_space<vmem>>, %arg4: memref<128x128xf32, #tpu.memory_space<vmem>>, %arg5: memref<128x128xf32, #tpu.memory_space<vmem>>, %arg6: memref<128x128xf32, #tpu.memory_space<vmem>>) attributes {dimension_semantics = [#tpu.dimension_semantics<arbitrary>], iteration_bounds = array<i64: 1>, scalar_prefetch = 0 : i64, scratch_operands = 1 : i64, tpu.core_type = #tpu.core_type<tc>, window_params = [{pipeline_mode = #tpu.pipeline_mode<synchronous>, transform_indices = @transform_0, window_bounds = array<i64: 128, 32>}, {pipeline_mode = #tpu.pipeline_mode<synchronous>, transform_indices = @transform_1, window_bounds = array<i64: 32, 128>}, {pipeline_mode = #tpu.pipeline_mode<synchronous>, transform_indices = @transform_2, window_bounds = array<i64: 1, 128>}, {transform_indices = @transform_3, window_bounds = array<i64: 128, 128>}, {transform_indices = @transform_4, window_bounds = array<i64: 128, 128>}]} {
    %c0_i32 = arith.constant 0 : i32
    %0 = arith.cmpi eq, %arg0, %c0_i32 : i32
    %1 = arith.extui %0 : i1 to i32
    %c0_i32_0 = arith.constant 0 : i32
    %2 = arith.cmpi ne, %1, %c0_i32_0 : i32
    scf.if %2 {
      %c0_8 = arith.constant 0 : index
      %c0_9 = arith.constant 0 : index
      %10 = vector.load %arg1[%c0_8, %c0_9] : memref<128x32xf32, #tpu.memory_space<vmem>>, vector<128x32xf32>
      %c0_10 = arith.constant 0 : index
      %c0_11 = arith.constant 0 : index
      %11 = vector.load %arg2[%c0_10, %c0_11] : memref<32x128xf32, #tpu.memory_space<vmem>>, vector<32x128xf32>
      %cst_12 = arith.constant dense<0.000000e+00> : vector<128x128xf32>
      %12 = tpu.matmul %10, %11, %cst_12 {dimension_numbers = #tpu.dot_dimension_numbers<[1], [0], [0], [1], [0, 0, 1, 1], [], []>} : vector<128x32xf32>, vector<32x128xf32>, vector<128x128xf32> -> vector<128x128xf32>
      %c0_13 = arith.constant 0 : index
      %c0_14 = arith.constant 0 : index
      %13 = vector.load %arg6[%c0_13, %c0_14] : memref<128x128xf32, #tpu.memory_space<vmem>>, vector<128x128xf32>
      tpu.vector_store %arg6[%c0_13, %c0_14], %12 {strides = array<i32>} : memref<128x128xf32, #tpu.memory_space<vmem>>, vector<128x128xf32>,
    } else {
    }
    %c0 = arith.constant 0 : index
    %c0_1 = arith.constant 0 : index
    %3 = vector.load %arg4[%c0, %c0_1] : memref<128x128xf32, #tpu.memory_space<vmem>>, vector<128x128xf32>
    %c0_2 = arith.constant 0 : index
    %c0_3 = arith.constant 0 : index
    %4 = vector.load %arg6[%c0_2, %c0_3] : memref<128x128xf32, #tpu.memory_space<vmem>>, vector<128x128xf32>
    %cst = arith.constant dense<0.000000e+00> : vector<128x128xf32>
    %5 = tpu.matmul %3, %4, %cst {dimension_numbers = #tpu.dot_dimension_numbers<[1], [0], [0], [1], [0, 0, 1, 1], [], []>} : vector<128x128xf32>, vector<128x128xf32>, vector<128x128xf32> -> vector<128x128xf32>
    %c0_4 = arith.constant 0 : index
    %c0_5 = arith.constant 0 : index
    %6 = vector.load %arg3[%c0_4, %c0_5] : memref<1x128xf32, #tpu.memory_space<vmem>>, vector<1x128xf32>
    %7 = vector.broadcast %6 : vector<1x128xf32> to vector<128x128xf32>
    %8 = arith.addf %5, %7 : vector<128x128xf32>
    %c0_6 = arith.constant 0 : index
    %c0_7 = arith.constant 0 : index
    %9 = vector.load %arg5[%c0_6, %c0_7] : memref<128x128xf32, #tpu.memory_space<vmem>>, vector<128x128xf32>
    tpu.vector_store %arg5[%c0_6, %c0_7], %8 {strides = array<i32>} : memref<128x128xf32, #tpu.memory_space<vmem>>, vector<128x128xf32>,
    return
  }
  func.func @transform_0(%arg0: i32) -> (i32, i32) {
    %c0_i32 = arith.constant 0 : i32
    %c0_i32_0 = arith.constant 0 : i32
    %c0_i32_1 = arith.constant 0 : i32
    return %c0_i32, %c0_i32_0 : i32, i32
  }
  func.func @transform_1(%arg0: i32) -> (i32, i32) {
    %c0_i32 = arith.constant 0 : i32
    %c0_i32_0 = arith.constant 0 : i32
    %c0_i32_1 = arith.constant 0 : i32
    return %c0_i32, %c0_i32_0 : i32, i32
  }
  func.func @transform_2(%arg0: i32) -> (i32, i32) {
    %c0_i32 = arith.constant 0 : i32
    %c0_i32_0 = arith.constant 0 : i32
    %c0_i32_1 = arith.constant 0 : i32
    return %c0_i32, %c0_i32_0 : i32, i32
  }
  func.func @transform_3(%arg0: i32) -> (i32, i32) {
    %c0_i32 = arith.constant 0 : i32
    %c0_i32_0 = arith.constant 0 : i32
    return %arg0, %c0_i32 : i32, i32
  }
  func.func @transform_4(%arg0: i32) -> (i32, i32) {
    %c0_i32 = arith.constant 0 : i32
    %c0_i32_0 = arith.constant 0 : i32
    return %arg0, %c0_i32 : i32, i32
  }
}

</mosaic_0001>

<llo_original>
// kernel: _gcn_pallas.1
$region0: #{_gcn_pallas.1}
  #allocation0 [shape = 'u32[]', space=smem, size = 0x4, offset = 0x4, fixed_abs, tag = 'smem constant byte address 0x4 - core index']
  #allocation1 [shape = 'u32[72,128]{1,0:T(1,128)}', space=vmem, size = 0x9000, scoped, tag = 'internal scratch']
  #allocation2 [shape = 'f32[128,128]{1,0:T(8,128)}', space=vmem, size = 0x10000, scoped, tag = 'scratch operand']
  %s0 = inlined_call_operand.vmem [shape: f32[128,32], index: 0, kind: input, shape index: {}]
  %s1 = inlined_call_operand.vmem [shape: f32[32,128], index: 1, kind: input, shape index: {}]
  %s2 = inlined_call_operand.vmem [shape: f32[1,128], index: 2, kind: input, shape index: {}]
  %s3 = inlined_call_operand.vmem [shape: f32[128,128], index: 3, kind: input, shape index: {}]
  %s4 = inlined_call_operand.hbm [shape: f32[128,128], index: 4, kind: output, shape index: {}]
  %s5 = sld [smem:[#allocation0]]
  $region30: #{_gcn_pallas.1} parent=0
    _
  %s7 = ssub.s32 1, %s5
  %s8 = scalar_select 0, %s7, %s5
  $region1: #{_gcn_pallas.1} parent=0
    #allocation3 [shape = 'u8[65536]{0}', space=vmem, size = 0x10000, scoped, tag = 'output window, operand 0, single buffered']
    #allocation4 [shape = 's32[1]{0}', space=sflag, size = 0x4, scoped, tag = 'scoped memory for _gcn_pallas.1']
    %9 = vsyncpa [#allocation4], 0
    // Predicated region
    $region2: #{_gcn_pallas.1} parent=1 // pred_check
      _
    $region3: #{_gcn_pallas.1} parent=1 // pred_check_branch
      %11 = sbr.rel (0) target = $region5
    $region4: #{_gcn_pallas.1} parent=1 // pred_region
      _
    $region5: #{_gcn_pallas.1} parent=1 // pred_fallthru
      _
    // Predicated region
    $region6: #{_gcn_pallas.1} parent=1 // pred_check
      _
    $region7: #{_gcn_pallas.1} parent=1 // pred_check_branch
      %13 = sbr.rel (0) target = $region9
    $region8: #{_gcn_pallas.1} parent=1 // pred_region
      _
    $region9: #{_gcn_pallas.1} parent=1 // pred_fallthru
      _
    // Predicated region
    $region10: #{_gcn_pallas.1} parent=1 // pred_check
      _
    $region11: #{_gcn_pallas.1} parent=1 // pred_check_branch
      %15 = sbr.rel (0) target = $region13
    $region12: #{_gcn_pallas.1} parent=1 // pred_region
      _
    $region13: #{_gcn_pallas.1} parent=1 // pred_fallthru
      _
    // Predicated region
    $region14: #{_gcn_pallas.1} parent=1 // pred_check
      _
    $region15: #{_gcn_pallas.1} parent=1 // pred_check_branch
      %17 = sbr.rel (0) target = $region17
    $region16: #{_gcn_pallas.1} parent=1 // pred_region
      _
    $region17: #{_gcn_pallas.1} parent=1 // pred_fallthru
      _
    %p18 = scmp.eq.s32.totalorder 0, 0
    // Predicated region
    $region18: #{_gcn_pallas.1} parent=1 // pred_check
      %p19 = pneg %p18
    $region19: #{_gcn_pallas.1} parent=1 // pred_check_branch
      %21 = sbr.rel (%p19) target = $region21
    $region20: #{_gcn_pallas.1} parent=1 // pred_region
      %v22 = vld [vmem:[%s0] sm:$0xff]
      %v23 = vld [vmem:[%s0 + $0x8] sm:$0xff]
      %v24 = vld [vmem:[%s0 + $0x10] sm:$0xff]
      %v25 = vld [vmem:[%s0 + $0x18] sm:$0xff]
      %v26 = vld [vmem:[%s0 + $0x20] sm:$0xff]
      %v27 = vld [vmem:[%s0 + $0x28] sm:$0xff]
      %v28 = vld [vmem:[%s0 + $0x30] sm:$0xff]
      %v29 = vld [vmem:[%s0 + $0x38] sm:$0xff]
      %v30 = vld [vmem:[%s0 + $0x40] sm:$0xff]
      %v31 = vld [vmem:[%s0 + $0x48] sm:$0xff]
      %v32 = vld [vmem:[%s0 + $0x50] sm:$0xff]
      %v33 = vld [vmem:[%s0 + $0x58] sm:$0xff]
      %v34 = vld [vmem:[%s0 + $0x60] sm:$0xff]
      %v35 = vld [vmem:[%s0 + $0x68] sm:$0xff]
      %v36 = vld [vmem:[%s0 + $0x70] sm:$0xff]
      %v37 = vld [vmem:[%s0 + $0x78] sm:$0xff]
      %v38 = vld [vmem:[%s1] sm:$0xff]
      %v39 = vld [vmem:[%s1 + $0x8] sm:$0xff]
      %v40 = vld [vmem:[%s1 + $0x10] sm:$0xff]
      %v41 = vld [vmem:[%s1 + $0x18] sm:$0xff]
      %vm42 = vcmask 261120
      %v44 = vsel %vm42, %v22, 0
      %v47 = vsel %vm42, %v23, 0
      %v50 = vsel %vm42, %v24, 0
      %v53 = vsel %vm42, %v25, 0
      %v56 = vsel %vm42, %v26, 0
      %v59 = vsel %vm42, %v27, 0
      %v62 = vsel %vm42, %v28, 0
      %v65 = vsel %vm42, %v29, 0
      %v68 = vsel %vm42, %v30, 0
      %v71 = vsel %vm42, %v31, 0
      %v74 = vsel %vm42, %v32, 0
      %v77 = vsel %vm42, %v33, 0
      %v80 = vsel %vm42, %v34, 0
      %v83 = vsel %vm42, %v35, 0
      %v86 = vsel %vm42, %v36, 0
      %v89 = vsel %vm42, %v37, 0
      %91 = vmatpush.msra.mxu0 0.0
      %92 = vmatpush.msra.mxu0 0.0
      %93 = vmatpush.msra.mxu0 0.0
      %94 = vmatpush.msra.mxu0 0.0
      %95 = vmatpush.msra.mxu0 0.0
      %96 = vmatpush.msra.mxu0 0.0
      %97 = vmatpush.msra.mxu0 0.0
      %98 = vmatpush.msra.mxu0 0.0
      %99 = vmatpush.msra.mxu0 0.0
      %100 = vmatpush.msra.mxu0 0.0
      %101 = vmatpush.msra.mxu0 0.0
      %102 = vmatpush.msra.mxu0 0.0
      %103 = vmatpush.msra.mxu0 %v41
      %104 = vmatpush.msra.mxu0 %v40
      %105 = vmatpush.msra.mxu0 %v39
      %106 = vmatpush.msra.mxu0 %v38
      %107 = vmatmul.f32.gmra.mxu0 %v44
      %v108 = vpop.f32.mrf.mxu0
      %v109 = vadd.f32 0.0, %v108
      %110 = vmatmul.f32.gmra.mxu0 %v47
      %v111 = vpop.f32.mrf.mxu0
      %v112 = vadd.f32 0.0, %v111
      %113 = vmatmul.f32.gmra.mxu0 %v50
      %v114 = vpop.f32.mrf.mxu0
      %v115 = vadd.f32 0.0, %v114
      %116 = vmatmul.f32.gmra.mxu0 %v53
      %v117 = vpop.f32.mrf.mxu0
      %v118 = vadd.f32 0.0, %v117
      %119 = vmatmul.f32.gmra.mxu0 %v56
      %v120 = vpop.f32.mrf.mxu0
      %v121 = vadd.f32 0.0, %v120
      %122 = vmatmul.f32.gmra.mxu0 %v59
      %v123 = vpop.f32.mrf.mxu0
      %v124 = vadd.f32 0.0, %v123
      %125 = vmatmul.f32.gmra.mxu0 %v62
      %v126 = vpop.f32.mrf.mxu0
      %v127 = vadd.f32 0.0, %v126
      %128 = vmatmul.f32.gmra.mxu0 %v65
      %v129 = vpop.f32.mrf.mxu0
      %v130 = vadd.f32 0.0, %v129
      %131 = vmatmul.f32.gmra.mxu0 %v68
      %v132 = vpop.f32.mrf.mxu0
      %v133 = vadd.f32 0.0, %v132
      %134 = vmatmul.f32.gmra.mxu0 %v71
      %v135 = vpop.f32.mrf.mxu0
      %v136 = vadd.f32 0.0, %v135
      %137 = vmatmul.f32.gmra.mxu0 %v74
      %v138 = vpop.f32.mrf.mxu0
      %v139 = vadd.f32 0.0, %v138
      %140 = vmatmul.f32.gmra.mxu0 %v77
      %v141 = vpop.f32.mrf.mxu0
      %v142 = vadd.f32 0.0, %v141
      %143 = vmatmul.f32.gmra.mxu0 %v80
      %v144 = vpop.f32.mrf.mxu0
      %v145 = vadd.f32 0.0, %v144
      %146 = vmatmul.f32.gmra.mxu0 %v83
      %v147 = vpop.f32.mrf.mxu0
      %v148 = vadd.f32 0.0, %v147
      %149 = vmatmul.f32.gmra.mxu0 %v86
      %v150 = vpop.f32.mrf.mxu0
      %v151 = vadd.f32 0.0, %v150
      %152 = vmatmul.f32.gmra.mxu0 %v89
      %v153 = vpop.f32.mrf.mxu0
      %v154 = vadd.f32 0.0, %v153
      %155 = vdwg.mxu0
      %156 = vst [vmem:[#allocation2] sm:$0xff] %v109
      %157 = vst [vmem:[#allocation2 + $0x8] sm:$0xff] %v112
      %158 = vst [vmem:[#allocation2 + $0x10] sm:$0xff] %v115
      %159 = vst [vmem:[#allocation2 + $0x18] sm:$0xff] %v118
      %160 = vst [vmem:[#allocation2 + $0x20] sm:$0xff] %v121
      %161 = vst [vmem:[#allocation2 + $0x28] sm:$0xff] %v124
      %162 = vst [vmem:[#allocation2 + $0x30] sm:$0xff] %v127
      %163 = vst [vmem:[#allocation2 + $0x38] sm:$0xff] %v130
      %164 = vst [vmem:[#allocation2 + $0x40] sm:$0xff] %v133
      %165 = vst [vmem:[#allocation2 + $0x48] sm:$0xff] %v136
      %166 = vst [vmem:[#allocation2 + $0x50] sm:$0xff] %v139
      %167 = vst [vmem:[#allocation2 + $0x58] sm:$0xff] %v142
      %168 = vst [vmem:[#allocation2 + $0x60] sm:$0xff] %v145
      %169 = vst [vmem:[#allocation2 + $0x68] sm:$0xff] %v148
      %170 = vst [vmem:[#allocation2 + $0x70] sm:$0xff] %v151
      %171 = vst [vmem:[#allocation2 + $0x78] sm:$0xff] %v154
    $region21: #{_gcn_pallas.1} parent=1 // pred_fallthru
      _
    %v172 = vld [vmem:[%s3] sm:$0xff]
    %v173 = vld [vmem:[%s3 + $0x8] sm:$0xff]
    %v174 = vld [vmem:[%s3 + $0x10] sm:$0xff]
    %v175 = vld [vmem:[%s3 + $0x18] sm:$0xff]
    %v176 = vld [vmem:[%s3 + $0x20] sm:$0xff]
    %v177 = vld [vmem:[%s3 + $0x28] sm:$0xff]
    %v178 = vld [vmem:[%s3 + $0x30] sm:$0xff]
    %v179 = vld [vmem:[%s3 + $0x38] sm:$0xff]
    %v180 = vld [vmem:[%s3 + $0x40] sm:$0xff]
    %v181 = vld [vmem:[%s3 + $0x48] sm:$0xff]
    %v182 = vld [vmem:[%s3 + $0x50] sm:$0xff]
    %v183 = vld [vmem:[%s3 + $0x58] sm:$0xff]
    %v184 = vld [vmem:[%s3 + $0x60] sm:$0xff]
    %v185 = vld [vmem:[%s3 + $0x68] sm:$0xff]
    %v186 = vld [vmem:[%s3 + $0x70] sm:$0xff]
    %v187 = vld [vmem:[%s3 + $0x78] sm:$0xff]
    %v188 = vld [vmem:[#allocation2] sm:$0xff]
    %v189 = vld [vmem:[#allocation2 + $0x8] sm:$0xff]
    %v190 = vld [vmem:[#allocation2 + $0x10] sm:$0xff]
    %v191 = vld [vmem:[#allocation2 + $0x18] sm:$0xff]
    %v192 = vld [vmem:[#allocation2 + $0x20] sm:$0xff]
    %v193 = vld [vmem:[#allocation2 + $0x28] sm:$0xff]
    %v194 = vld [vmem:[#allocation2 + $0x30] sm:$0xff]
    %v195 = vld [vmem:[#allocation2 + $0x38] sm:$0xff]
    %v196 = vld [vmem:[#allocation2 + $0x40] sm:$0xff]
    %v197 = vld [vmem:[#allocation2 + $0x48] sm:$0xff]
    %v198 = vld [vmem:[#allocation2 + $0x50] sm:$0xff]
    %v199 = vld [vmem:[#allocation2 + $0x58] sm:$0xff]
    %v200 = vld [vmem:[#allocation2 + $0x60] sm:$0xff]
    %v201 = vld [vmem:[#allocation2 + $0x68] sm:$0xff]
    %v202 = vld [vmem:[#allocation2 + $0x70] sm:$0xff]
    %v203 = vld [vmem:[#allocation2 + $0x78] sm:$0xff]
    %v204 = vld [vmem:[%s2] sm:$0x1]
    %v206 = vperm.slane %v204, 0
    %208 = vmatpush.msra.mxu0 %v203
    %209 = vmatpush.msra.mxu0 %v202
    %210 = vmatpush.msra.mxu0 %v201
    %211 = vmatpush.msra.mxu0 %v200
    %212 = vmatpush.msra.mxu0 %v199
    %213 = vmatpush.msra.mxu0 %v198
    %214 = vmatpush.msra.mxu0 %v197
    %215 = vmatpush.msra.mxu0 %v196
    %216 = vmatpush.msra.mxu0 %v195
    %217 = vmatpush.msra.mxu0 %v194
    %218 = vmatpush.msra.mxu0 %v193
    %219 = vmatpush.msra.mxu0 %v192
    %220 = vmatpush.msra.mxu0 %v191
    %221 = vmatpush.msra.mxu0 %v190
    %222 = vmatpush.msra.mxu0 %v189
    %223 = vmatpush.msra.mxu0 %v188
    %224 = vmatmul.f32.gmra.mxu0 %v172
    %v225 = vpop.f32.mrf.mxu0
    %v226 = vadd.f32 %v206, %v225
    %227 = vmatmul.f32.gmra.mxu0 %v173
    %v228 = vpop.f32.mrf.mxu0
    %v229 = vadd.f32 %v206, %v228
    %230 = vmatmul.f32.gmra.mxu0 %v174
    %v231 = vpop.f32.mrf.mxu0
    %v232 = vadd.f32 %v206, %v231
    %233 = vmatmul.f32.gmra.mxu0 %v175
    %v234 = vpop.f32.mrf.mxu0
    %v235 = vadd.f32 %v206, %v234
    %236 = vmatmul.f32.gmra.mxu0 %v176
    %v237 = vpop.f32.mrf.mxu0
    %v238 = vadd.f32 %v206, %v237
    %239 = vmatmul.f32.gmra.mxu0 %v177
    %v240 = vpop.f32.mrf.mxu0
    %v241 = vadd.f32 %v206, %v240
    %242 = vmatmul.f32.gmra.mxu0 %v178
    %v243 = vpop.f32.mrf.mxu0
    %v244 = vadd.f32 %v206, %v243
    %245 = vmatmul.f32.gmra.mxu0 %v179
    %v246 = vpop.f32.mrf.mxu0
    %v247 = vadd.f32 %v206, %v246
    %248 = vmatmul.f32.gmra.mxu0 %v180
    %v249 = vpop.f32.mrf.mxu0
    %v250 = vadd.f32 %v206, %v249
    %251 = vmatmul.f32.gmra.mxu0 %v181
    %v252 = vpop.f32.mrf.mxu0
    %v253 = vadd.f32 %v206, %v252
    %254 = vmatmul.f32.gmra.mxu0 %v182
    %v255 = vpop.f32.mrf.mxu0
    %v256 = vadd.f32 %v206, %v255
    %257 = vmatmul.f32.gmra.mxu0 %v183
    %v258 = vpop.f32.mrf.mxu0
    %v259 = vadd.f32 %v206, %v258
    %260 = vmatmul.f32.gmra.mxu0 %v184
    %v261 = vpop.f32.mrf.mxu0
    %v262 = vadd.f32 %v206, %v261
    %263 = vmatmul.f32.gmra.mxu0 %v185
    %v264 = vpop.f32.mrf.mxu0
    %v265 = vadd.f32 %v206, %v264
    %266 = vmatmul.f32.gmra.mxu0 %v186
    %v267 = vpop.f32.mrf.mxu0
    %v268 = vadd.f32 %v206, %v267
    %269 = vmatmul.f32.gmra.mxu0 %v187
    %v270 = vpop.f32.mrf.mxu0
    %v271 = vadd.f32 %v206, %v270
    %272 = vdwg.mxu0
    %273 = vst [vmem:[#allocation3] sm:$0xff] %v226
    %274 = vst [vmem:[#allocation3 + $0x8] sm:$0xff] %v229
    %275 = vst [vmem:[#allocation3 + $0x10] sm:$0xff] %v232
    %276 = vst [vmem:[#allocation3 + $0x18] sm:$0xff] %v235
    %277 = vst [vmem:[#allocation3 + $0x20] sm:$0xff] %v238
    %278 = vst [vmem:[#allocation3 + $0x28] sm:$0xff] %v241
    %279 = vst [vmem:[#allocation3 + $0x30] sm:$0xff] %v244
    %280 = vst [vmem:[#allocation3 + $0x38] sm:$0xff] %v247
    %281 = vst [vmem:[#allocation3 + $0x40] sm:$0xff] %v250
    %282 = vst [vmem:[#allocation3 + $0x48] sm:$0xff] %v253
    %283 = vst [vmem:[#allocation3 + $0x50] sm:$0xff] %v256
    %284 = vst [vmem:[#allocation3 + $0x58] sm:$0xff] %v259
    %285 = vst [vmem:[#allocation3 + $0x60] sm:$0xff] %v262
    %286 = vst [vmem:[#allocation3 + $0x68] sm:$0xff] %v265
    %287 = vst [vmem:[#allocation3 + $0x70] sm:$0xff] %v268
    %288 = vst [vmem:[#allocation3 + $0x78] sm:$0xff] %v271
    // Predicated region
    $region22: #{_gcn_pallas.1} parent=1 // pred_check
      _
    $region23: #{_gcn_pallas.1} parent=1 // pred_check_branch
      %290 = sbr.rel (0) target = $region25
    $region24: #{_gcn_pallas.1} parent=1 // pred_region
      %292 = vsyncadd [#allocation4], 0
      %s293 = sshll.u32 [#allocation3], 4
      %s294 = int_to_ptr.vmem [resolvable:$true] %s293
      %s295 = sshll.u32 %s4, 4
      %s296 = int_to_ptr.hbm [resolvable:$true] %s295
      %301 = dma.vmem_to_hbm [thread:$0]  %s294, 2048, %s296, [#allocation4], 128, 128, 8
    $region25: #{_gcn_pallas.1} parent=1 // pred_fallthru
      _
    // Predicated region
    $region26: #{_gcn_pallas.1} parent=1 // pred_check
      _
    $region27: #{_gcn_pallas.1} parent=1 // pred_check_branch
      %303 = sbr.rel (0) target = $region29
    $region28: #{_gcn_pallas.1} parent=1 // pred_region
      %305 = dma.done [#allocation4], 2048
    $region29: #{_gcn_pallas.1} parent=1 // pred_fallthru
      _
    %306 = vsyncpa [#allocation4], 1

</llo_original>
